<compile_context>
chip_gen: v7x
topology: tpu7x:2x2x1
jax: 0.10.0
libtpu: 0.0.40
codegen_flags: <defaults>
</compile_context>

<pallas_src>
import functools
import random

import jax
import jax.numpy as jnp
from jax.experimental import pallas as pl
from jax.experimental.pallas import tpu as pltpu


def calculate_output_length(length_in, kernel_size, stride, padding, dilation):
    return (length_in + 2 * padding - dilation * (kernel_size - 1) - 1) // stride + 1


# ----------------------------------------------------------------------------
# Fused kernel: all conv1x1+BN+ReLU layers + final Linear for one batch tile.
# ----------------------------------------------------------------------------
def _fused_tcn_kernel(x_ref, *refs, num_layers):
    """x_ref: (C0, TB*L).  refs = [wT_i, scale_i, shift_i]*num_layers, wblk, fcb, out_ref."""
    out_ref = refs[-1]
    wblk_ref = refs[3 * num_layers]
    fcb_ref = refs[3 * num_layers + 1]

    h = x_ref[...]                                            # (C0, TB*L) f32
    for i in range(num_layers):                               # static unroll over layers
        w_t = refs[3 * i][...]                                # (Cout, Cin)
        scale = refs[3 * i + 1][...]                          # (Cout, 1)  BN fold
        shift = refs[3 * i + 2][...]                          # (Cout, 1)
        h = jnp.dot(w_t, h, preferred_element_type=jnp.float32)   # (Cout, TB*L)
        h = jnp.maximum(h * scale + shift, 0.0)               # BN + ReLU (Dropout/MaxPool = id)

    # Final Linear over L: out[p, b*F + f] = sum_l h[p, b*L + l] * fc_w[l, f]
    # realized as one lane-dense matmul against kron(I_TB, fc_w); bias added in-kernel.
    out = jnp.dot(h, wblk_ref[...], preferred_element_type=jnp.float32)   # (P, TB*F)
    out_ref[...] = (out + fcb_ref[...]).astype(out_ref.dtype)


def _pick_tile_batches(batch, length, feat_out, target_lanes=512):
    """Largest divisor TB of `batch` whose blocks are lane-aligned and fit the lane target."""
    best = None
    for tb in range(1, batch + 1):
        if batch % tb != 0 or tb * length > target_lanes:
            continue
        aligned = (tb == batch) or (
            (tb * length) % 128 == 0 and (tb * feat_out) % 128 == 0)
        if aligned:
            best = tb
    # Fall back to the whole batch (block == full array is always legal).
    return best if best is not None else batch


# ----------------------------------------------------------------------------
# Model wrapper with deterministic synthetic parameters.
# ----------------------------------------------------------------------------
class TCNModelPallas:
    def __init__(self, cnn_dropout, tcn_num_layers, num_obs, num_pred,
                 num_feature_input, num_feature_output, key, tile_lanes=512):
        del cnn_dropout  # inference semantics: Dropout is identity
        random.seed(0)   # deterministic channel widths (mirrors the PyTorch ctor)
        self.cnn_channels = []
        for i in range(tcn_num_layers):
            if i == tcn_num_layers - 1:
                self.cnn_channels.append(num_pred)
            else:
                self.cnn_channels.append(num_pred * random.randint(2, 10))

        output_len = num_feature_input
        for _ in range(tcn_num_layers):
            output_len = calculate_output_length(output_len, 1, 1, 0, 1)  # conv
            output_len = calculate_output_length(output_len, 1, 1, 0, 1)  # maxpool
        self.output_len = output_len            # == num_feature_input (k=1 everywhere)
        self.num_pred = num_pred
        self.num_feature_output = num_feature_output
        self.tile_lanes = tile_lanes
        self.eps = 1e-5

        # Per conv block: wT (Cout, Cin) and conv-bias+BN folded into per-channel
        # scale/shift columns (Cout, 1) matching the channels-on-sublane layout.
        self.layers = []
        for i, out_c in enumerate(self.cnn_channels):
            in_c = num_obs if i == 0 else self.cnn_channels[i - 1]
            key, k1, k2, k3, k4, k5, k6 = jax.random.split(key, 7)
            w_t = jax.random.normal(k1, (out_c, in_c), jnp.float32) * 0.1
            b = jax.random.normal(k2, (out_c,), jnp.float32) * 0.1
            gamma = 1.0 + 0.1 * jax.random.normal(k3, (out_c,), jnp.float32)
            beta = 0.1 * jax.random.normal(k4, (out_c,), jnp.float32)
            mean = 0.1 * jax.random.normal(k5, (out_c,), jnp.float32)
            var = 1.0 + 0.1 * jnp.abs(jax.random.normal(k6, (out_c,), jnp.float32))
            scale = gamma / jnp.sqrt(var + self.eps)
            shift = (b - mean) * scale + beta
            self.layers.append((w_t, scale.reshape(-1, 1), shift.reshape(-1, 1)))

        key, kf1, kf2 = jax.random.split(key, 3)
        self.fc_w = jax.random.normal(kf1, (output_len, num_feature_output),
                                      jnp.float32) * 0.1
        self.fc_b = jax.random.normal(kf2, (num_feature_output,), jnp.float32) * 0.1
        self._final_cache = {}   # TB -> (block-diag fc weight, tiled fc bias)

    def _final_mats(self, tb):
        if tb not in self._final_cache:
            wblk = jnp.kron(jnp.eye(tb, dtype=jnp.float32), self.fc_w)      # (tb*L, tb*F)
            fcb = jnp.tile(self.fc_b.reshape(1, -1), (1, tb))               # (1, tb*F)
            self._final_cache[tb] = (wblk, fcb)
        return self._final_cache[tb]

    def __call__(self, x):
        # x: (B, num_obs, L)  (PyTorch NCL layout)
        batch, c0, length = x.shape
        assert length == self.output_len
        num_pred, feat_out = self.num_pred, self.num_feature_output

        tb = _pick_tile_batches(batch, length, feat_out, self.tile_lanes)
        grid = (batch // tb,)
        wblk, fcb_tiled = self._final_mats(tb)

        # channels on sublanes, (batch, length) flattened on lanes: column = b*L + l.
        # This is the only wrapper-side layout op on the input; intermediates never
        # leave VMEM.  TODO(synk): training-mode Dropout / BN batch stats not modeled.
        x_flat = jnp.transpose(x, (1, 0, 2)).reshape(c0, batch * length)

        inputs = [x_flat]
        in_specs = [pl.BlockSpec((c0, tb * length), lambda i: (0, i))]
        for w_t, scale, shift in self.layers:
            inputs += [w_t, scale, shift]
            in_specs += [
                pl.BlockSpec(w_t.shape, lambda i: (0, 0)),       # resident in VMEM
                pl.BlockSpec(scale.shape, lambda i: (0, 0)),
                pl.BlockSpec(shift.shape, lambda i: (0, 0)),
            ]
        inputs += [wblk, fcb_tiled]
        in_specs += [
            pl.BlockSpec(wblk.shape, lambda i: (0, 0)),
            pl.BlockSpec(fcb_tiled.shape, lambda i: (0, 0)),
        ]

        kernel = functools.partial(_fused_tcn_kernel, num_layers=len(self.layers))
        out2 = pl.pallas_call(
            kernel,
            out_shape=jax.ShapeDtypeStruct((num_pred, batch * feat_out), jnp.float32),
            grid=grid,
            in_specs=in_specs,
            out_specs=pl.BlockSpec((num_pred, tb * feat_out), lambda i: (0, i)),
            compiler_params=pltpu.CompilerParams(
                dimension_semantics=("parallel",)),
        )(*inputs)

        # (P, B*F) lane-dense slab -> (B, P, F); tiny final reshape/transpose only.
        return out2.reshape(num_pred, batch, feat_out).transpose(1, 0, 2)

    # pure-JAX reference for sanity checking
    def reference(self, x):
        h = x.astype(jnp.float32)                                 # (B, C, L)
        for w_t, scale, shift in self.layers:
            h = jnp.einsum('oc,bcl->bol', w_t, h,
                           precision=jax.lax.Precision.HIGHEST)
            h = jnp.maximum(h * scale[None, :, :] + shift[None, :, :], 0.0)
        return jnp.einsum('bpl,lf->bpf', h, self.fc_w,
                          precision=jax.lax.Precision.HIGHEST) + self.fc_b


if __name__ == "__main__":
    B = 32
    num_obs = 4
    num_pred = 2
    num_feature_input = 16
    num_feature_output = 8
    tcn_num_layers = 3

    key = jax.random.PRNGKey(0)
    key, kx = jax.random.split(key)
    x = jax.random.normal(kx, (B, num_obs, num_feature_input), jnp.float32)

    model = TCNModelPallas(cnn_dropout=0.1, tcn_num_layers=tcn_num_layers,
                           num_obs=num_obs, num_pred=num_pred,
                           num_feature_input=num_feature_input,
                           num_feature_output=num_feature_output,
                           key=key,
                           tile_lanes=256)   # -> TB=16, grid=(2,): exercises the tiled path

    out = jax.block_until_ready(model(x))
    assert out.shape == (B, num_pred, num_feature_output), out.shape

    ref = jax.block_until_ready(model.reference(x))
    assert jnp.allclose(out, ref, atol=1e-3, rtol=1e-3), float(jnp.abs(out - ref).max())

    print("KERNEL_OK")
</pallas_src>

<mosaic_0001>
module attributes {stable_mosaic.version = 11 : i64} {
  func.func @_fused_tcn_kernel(%arg0: i32, %arg1: memref<4x256xf32, #tpu.memory_space<vmem>>, %arg2: memref<16x4xf32, #tpu.memory_space<vmem>>, %arg3: memref<16x1xf32, #tpu.memory_space<vmem>>, %arg4: memref<16x1xf32, #tpu.memory_space<vmem>>, %arg5: memref<16x16xf32, #tpu.memory_space<vmem>>, %arg6: memref<16x1xf32, #tpu.memory_space<vmem>>, %arg7: memref<16x1xf32, #tpu.memory_space<vmem>>, %arg8: memref<2x16xf32, #tpu.memory_space<vmem>>, %arg9: memref<2x1xf32, #tpu.memory_space<vmem>>, %arg10: memref<2x1xf32, #tpu.memory_space<vmem>>, %arg11: memref<256x128xf32, #tpu.memory_space<vmem>>, %arg12: memref<1x128xf32, #tpu.memory_space<vmem>>, %arg13: memref<2x128xf32, #tpu.memory_space<vmem>>) attributes {dimension_semantics = [#tpu.dimension_semantics<parallel>], iteration_bounds = array<i64: 2>, scalar_prefetch = 0 : i64, scratch_operands = 0 : i64, tpu.core_type = #tpu.core_type<tc>, window_params = [{transform_indices = @transform_0, window_bounds = array<i64: 4, 256>}, {pipeline_mode = #tpu.pipeline_mode<synchronous>, transform_indices = @transform_1, window_bounds = array<i64: 16, 4>}, {pipeline_mode = #tpu.pipeline_mode<synchronous>, transform_indices = @transform_2, window_bounds = array<i64: 16, 1>}, {pipeline_mode = #tpu.pipeline_mode<synchronous>, transform_indices = @transform_3, window_bounds = array<i64: 16, 1>}, {pipeline_mode = #tpu.pipeline_mode<synchronous>, transform_indices = @transform_4, window_bounds = array<i64: 16, 16>}, {pipeline_mode = #tpu.pipeline_mode<synchronous>, transform_indices = @transform_5, window_bounds = array<i64: 16, 1>}, {pipeline_mode = #tpu.pipeline_mode<synchronous>, transform_indices = @transform_6, window_bounds = array<i64: 16, 1>}, {pipeline_mode = #tpu.pipeline_mode<synchronous>, transform_indices = @transform_7, window_bounds = array<i64: 2, 16>}, {pipeline_mode = #tpu.pipeline_mode<synchronous>, transform_indices = @transform_8, window_bounds = array<i64: 2, 1>}, {pipeline_mode = #tpu.pipeline_mode<synchronous>, transform_indices = @transform_9, window_bounds = array<i64: 2, 1>}, {pipeline_mode = #tpu.pipeline_mode<synchronous>, transform_indices = @transform_10, window_bounds = array<i64: 256, 128>}, {pipeline_mode = #tpu.pipeline_mode<synchronous>, transform_indices = @transform_11, window_bounds = array<i64: 1, 128>}, {transform_indices = @transform_12, window_bounds = array<i64: 2, 128>}]} {
    %c0 = arith.constant 0 : index
    %c0_0 = arith.constant 0 : index
    %0 = vector.load %arg1[%c0, %c0_0] : memref<4x256xf32, #tpu.memory_space<vmem>>, vector<4x256xf32>
    %c0_1 = arith.constant 0 : index
    %c0_2 = arith.constant 0 : index
    %1 = vector.load %arg2[%c0_1, %c0_2] : memref<16x4xf32, #tpu.memory_space<vmem>>, vector<16x4xf32>
    %c0_3 = arith.constant 0 : index
    %c0_4 = arith.constant 0 : index
    %2 = vector.load %arg3[%c0_3, %c0_4] : memref<16x1xf32, #tpu.memory_space<vmem>>, vector<16x1xf32>
    %c0_5 = arith.constant 0 : index
    %c0_6 = arith.constant 0 : index
    %3 = vector.load %arg4[%c0_5, %c0_6] : memref<16x1xf32, #tpu.memory_space<vmem>>, vector<16x1xf32>
    %cst = arith.constant dense<0.000000e+00> : vector<16x256xf32>
    %4 = tpu.matmul %1, %0, %cst {dimension_numbers = #tpu.dot_dimension_numbers<[1], [0], [0], [1], [0, 0, 1, 1], [], []>} : vector<16x4xf32>, vector<4x256xf32>, vector<16x256xf32> -> vector<16x256xf32>
    %5 = vector.broadcast %2 : vector<16x1xf32> to vector<16x256xf32>
    %6 = arith.mulf %4, %5 : vector<16x256xf32>
    %7 = vector.broadcast %3 : vector<16x1xf32> to vector<16x256xf32>
    %8 = arith.addf %6, %7 : vector<16x256xf32>
    %cst_7 = arith.constant 0.000000e+00 : f32
    %9 = vector.broadcast %cst_7 : f32 to vector<16x256xf32>
    %10 = arith.maximumf %8, %9 : vector<16x256xf32>
    %c0_8 = arith.constant 0 : index
    %c0_9 = arith.constant 0 : index
    %11 = vector.load %arg5[%c0_8, %c0_9] : memref<16x16xf32, #tpu.memory_space<vmem>>, vector<16x16xf32>
    %c0_10 = arith.constant 0 : index
    %c0_11 = arith.constant 0 : index
    %12 = vector.load %arg6[%c0_10, %c0_11] : memref<16x1xf32, #tpu.memory_space<vmem>>, vector<16x1xf32>
    %c0_12 = arith.constant 0 : index
    %c0_13 = arith.constant 0 : index
    %13 = vector.load %arg7[%c0_12, %c0_13] : memref<16x1xf32, #tpu.memory_space<vmem>>, vector<16x1xf32>
    %cst_14 = arith.constant dense<0.000000e+00> : vector<16x256xf32>
    %14 = tpu.matmul %11, %10, %cst_14 {dimension_numbers = #tpu.dot_dimension_numbers<[1], [0], [0], [1], [0, 0, 1, 1], [], []>} : vector<16x16xf32>, vector<16x256xf32>, vector<16x256xf32> -> vector<16x256xf32>
    %15 = vector.broadcast %12 : vector<16x1xf32> to vector<16x256xf32>
    %16 = arith.mulf %14, %15 : vector<16x256xf32>
    %17 = vector.broadcast %13 : vector<16x1xf32> to vector<16x256xf32>
    %18 = arith.addf %16, %17 : vector<16x256xf32>
    %cst_15 = arith.constant 0.000000e+00 : f32
    %19 = vector.broadcast %cst_15 : f32 to vector<16x256xf32>
    %20 = arith.maximumf %18, %19 : vector<16x256xf32>
    %c0_16 = arith.constant 0 : index
    %c0_17 = arith.constant 0 : index
    %21 = vector.load %arg8[%c0_16, %c0_17] : memref<2x16xf32, #tpu.memory_space<vmem>>, vector<2x16xf32>
    %c0_18 = arith.constant 0 : index
    %c0_19 = arith.constant 0 : index
    %22 = vector.load %arg9[%c0_18, %c0_19] : memref<2x1xf32, #tpu.memory_space<vmem>>, vector<2x1xf32>
    %c0_20 = arith.constant 0 : index
    %c0_21 = arith.constant 0 : index
    %23 = vector.load %arg10[%c0_20, %c0_21] : memref<2x1xf32, #tpu.memory_space<vmem>>, vector<2x1xf32>
    %cst_22 = arith.constant dense<0.000000e+00> : vector<2x256xf32>
    %24 = tpu.matmul %21, %20, %cst_22 {dimension_numbers = #tpu.dot_dimension_numbers<[1], [0], [0], [1], [0, 0, 1, 1], [], []>} : vector<2x16xf32>, vector<16x256xf32>, vector<2x256xf32> -> vector<2x256xf32>
    %25 = vector.broadcast %22 : vector<2x1xf32> to vector<2x256xf32>
    %26 = arith.mulf %24, %25 : vector<2x256xf32>
    %27 = vector.broadcast %23 : vector<2x1xf32> to vector<2x256xf32>
    %28 = arith.addf %26, %27 : vector<2x256xf32>
    %cst_23 = arith.constant 0.000000e+00 : f32
    %29 = vector.broadcast %cst_23 : f32 to vector<2x256xf32>
    %30 = arith.maximumf %28, %29 : vector<2x256xf32>
    %c0_24 = arith.constant 0 : index
    %c0_25 = arith.constant 0 : index
    %31 = vector.load %arg11[%c0_24, %c0_25] : memref<256x128xf32, #tpu.memory_space<vmem>>, vector<256x128xf32>
    %cst_26 = arith.constant dense<0.000000e+00> : vector<2x128xf32>
    %32 = tpu.matmul %30, %31, %cst_26 {dimension_numbers = #tpu.dot_dimension_numbers<[1], [0], [0], [1], [0, 0, 1, 1], [], []>} : vector<2x256xf32>, vector<256x128xf32>, vector<2x128xf32> -> vector<2x128xf32>
    %c0_27 = arith.constant 0 : index
    %c0_28 = arith.constant 0 : index
    %33 = vector.load %arg12[%c0_27, %c0_28] : memref<1x128xf32, #tpu.memory_space<vmem>>, vector<1x128xf32>
    %34 = vector.broadcast %33 : vector<1x128xf32> to vector<2x128xf32>
    %35 = arith.addf %32, %34 : vector<2x128xf32>
    %c0_29 = arith.constant 0 : index
    %c0_30 = arith.constant 0 : index
    %36 = vector.load %arg13[%c0_29, %c0_30] : memref<2x128xf32, #tpu.memory_space<vmem>>, vector<2x128xf32>
    tpu.vector_store %arg13[%c0_29, %c0_30], %35 {strides = array<i32>} : memref<2x128xf32, #tpu.memory_space<vmem>>, vector<2x128xf32>,
    return
  }
  func.func @transform_0(%arg0: i32) -> (i32, i32) {
    %c0_i32 = arith.constant 0 : i32
    %c0_i32_0 = arith.constant 0 : i32
    return %c0_i32, %arg0 : i32, i32
  }
  func.func @transform_1(%arg0: i32) -> (i32, i32) {
    %c0_i32 = arith.constant 0 : i32
    %c0_i32_0 = arith.constant 0 : i32
    %c0_i32_1 = arith.constant 0 : i32
    return %c0_i32, %c0_i32_0 : i32, i32
  }
  func.func @transform_2(%arg0: i32) -> (i32, i32) {
    %c0_i32 = arith.constant 0 : i32
    %c0_i32_0 = arith.constant 0 : i32
    %c0_i32_1 = arith.constant 0 : i32
    return %c0_i32, %c0_i32_0 : i32, i32
  }
  func.func @transform_3(%arg0: i32) -> (i32, i32) {
    %c0_i32 = arith.constant 0 : i32
    %c0_i32_0 = arith.constant 0 : i32
    %c0_i32_1 = arith.constant 0 : i32
    return %c0_i32, %c0_i32_0 : i32, i32
  }
  func.func @transform_4(%arg0: i32) -> (i32, i32) {
    %c0_i32 = arith.constant 0 : i32
    %c0_i32_0 = arith.constant 0 : i32
    %c0_i32_1 = arith.constant 0 : i32
    return %c0_i32, %c0_i32_0 : i32, i32
  }
  func.func @transform_5(%arg0: i32) -> (i32, i32) {
    %c0_i32 = arith.constant 0 : i32
    %c0_i32_0 = arith.constant 0 : i32
    %c0_i32_1 = arith.constant 0 : i32
    return %c0_i32, %c0_i32_0 : i32, i32
  }
  func.func @transform_6(%arg0: i32) -> (i32, i32) {
    %c0_i32 = arith.constant 0 : i32
    %c0_i32_0 = arith.constant 0 : i32
    %c0_i32_1 = arith.constant 0 : i32
    return %c0_i32, %c0_i32_0 : i32, i32
  }
  func.func @transform_7(%arg0: i32) -> (i32, i32) {
    %c0_i32 = arith.constant 0 : i32
    %c0_i32_0 = arith.constant 0 : i32
    %c0_i32_1 = arith.constant 0 : i32
    return %c0_i32, %c0_i32_0 : i32, i32
  }
  func.func @transform_8(%arg0: i32) -> (i32, i32) {
    %c0_i32 = arith.constant 0 : i32
    %c0_i32_0 = arith.constant 0 : i32
    %c0_i32_1 = arith.constant 0 : i32
    return %c0_i32, %c0_i32_0 : i32, i32
  }
  func.func @transform_9(%arg0: i32) -> (i32, i32) {
    %c0_i32 = arith.constant 0 : i32
    %c0_i32_0 = arith.constant 0 : i32
    %c0_i32_1 = arith.constant 0 : i32
    return %c0_i32, %c0_i32_0 : i32, i32
  }
  func.func @transform_10(%arg0: i32) -> (i32, i32) {
    %c0_i32 = arith.constant 0 : i32
    %c0_i32_0 = arith.constant 0 : i32
    %c0_i32_1 = arith.constant 0 : i32
    return %c0_i32, %c0_i32_0 : i32, i32
  }
  func.func @transform_11(%arg0: i32) -> (i32, i32) {
    %c0_i32 = arith.constant 0 : i32
    %c0_i32_0 = arith.constant 0 : i32
    %c0_i32_1 = arith.constant 0 : i32
    return %c0_i32, %c0_i32_0 : i32, i32
  }
  func.func @transform_12(%arg0: i32) -> (i32, i32) {
    %c0_i32 = arith.constant 0 : i32
    %c0_i32_0 = arith.constant 0 : i32
    return %c0_i32, %arg0 : i32, i32
  }
}

</mosaic_0001>

<llo_original>
// kernel: tpu_custom_call.1
$region0: #{tpu_custom_call.1}
  #allocation0 [shape = 'u32[]', space=smem, size = 0x4, offset = 0x4, fixed_abs, tag = 'smem constant byte address 0x4 - core index']
  #allocation1 [shape = 'u32[144,128]{1,0:T(1,128)}', space=vmem, size = 0x12000, scoped, tag = 'internal scratch']
  %s0 = inlined_call_operand.vmem [shape: f32[4,512], index: 0, kind: input, shape index: {}]
  %s1 = inlined_call_operand.vmem [shape: f32[16,4], index: 1, kind: input, shape index: {}]
  %s2 = inlined_call_operand.vmem [shape: f32[16,1], index: 2, kind: input, shape index: {}]
  %s3 = inlined_call_operand.vmem [shape: f32[16,1], index: 3, kind: input, shape index: {}]
  %s4 = inlined_call_operand.vmem [shape: f32[16,16], index: 4, kind: input, shape index: {}]
  %s5 = inlined_call_operand.vmem [shape: f32[16,1], index: 5, kind: input, shape index: {}]
  %s6 = inlined_call_operand.vmem [shape: f32[16,1], index: 6, kind: input, shape index: {}]
  %s7 = inlined_call_operand.vmem [shape: f32[2,16], index: 7, kind: input, shape index: {}]
  %s8 = inlined_call_operand.vmem [shape: f32[2,1], index: 8, kind: input, shape index: {}]
  %s9 = inlined_call_operand.vmem [shape: f32[2,1], index: 9, kind: input, shape index: {}]
  %s10 = inlined_call_operand.hbm [shape: f32[256,128], index: 10, kind: input, shape index: {}]
  %s11 = inlined_call_operand.vmem [shape: f32[1,128], index: 11, kind: input, shape index: {}]
  %s12 = inlined_call_operand.hbm [shape: f32[2,256], index: 12, kind: output, shape index: {}]
  %s13 = sld [smem:[#allocation0]]
  $region85: #{tpu_custom_call.1} parent=0
    _
  %s15 = ssub.s32 1, %s13
  %s16 = scalar_select 0, %s15, %s13
  $region1: #{tpu_custom_call.1} parent=0
    #allocation2 [shape = 'u8[131072]{0}', space=vmem, size = 0x20000, scoped, tag = 'input window, operand 10, single buffered']
    #allocation3 [shape = 's32[2]{0}', space=sflag, size = 0x8, scoped, tag = 'scoped memory for tpu_custom_call.1']
    #allocation4 [shape = 's32[2]{0}', space=sflag, size = 0x8, scoped, tag = 'scoped memory for tpu_custom_call.1']
    #allocation5 [shape = 'u8[2048]{0}', space=vmem, size = 0x800, scoped, tag = 'output window, operand 0']
    %17 = vsyncpa [#allocation3], 0
    %18 = vsyncpa [#allocation4], 0
    %s19 = scalar_lea.sflag [#allocation4], 1
    %20 = vsyncpa %s19, 0
    loop: start=0, step=1, limit=4
    $region2: #{tpu_custom_call.1} parent=1 // loop_pre_header
      _
    $region3: #{tpu_custom_call.1} parent=1 // loop_header
      %s22 = sphi 0, %s26
      %p23 = scmp.ge.s32.totalorder %s22, 4
      %s32 = sphi 0, %s34
      %s35 = sphi 0, %s32
      %s36 = sphi 0, %s35
      %s52 = sphi 0, %s36
      %s56 = sphi 0, %s56
      %s58 = sphi 0, %s56
      %s59 = sphi 0, %s58
      %s73 = sphi 0, %s59
      %s77 = sphi 0, %s77
      %s79 = sphi 0, %s77
      %s80 = sphi 0, %s79
      %s94 = sphi 0, %s80
      %s98 = sphi 0, %s98
      %s100 = sphi 0, %s98
      %s101 = sphi 0, %s100
      %s115 = sphi 0, %s101
      %s119 = sphi 0, %s119
      %s121 = sphi 0, %s119
      %s122 = sphi 0, %s121
      %s136 = sphi 0, %s122
      %s140 = sphi 0, %s140
      %s142 = sphi 0, %s140
      %s143 = sphi 0, %s142
      %s157 = sphi 0, %s143
      %s161 = sphi 0, %s161
      %s163 = sphi 0, %s161
      %s164 = sphi 0, %s163
      %s178 = sphi 0, %s164
      %s182 = sphi 0, %s182
      %s184 = sphi 0, %s182
      %s185 = sphi 0, %s184
      %s199 = sphi 0, %s185
      %s203 = sphi 0, %s203
      %s205 = sphi 0, %s203
      %s206 = sphi 0, %s205
      %s220 = sphi 0, %s206
      %s224 = sphi 0, %s224
      %s226 = sphi 0, %s224
      %s227 = sphi 0, %s226
      %s241 = sphi 0, %s227
      %s245 = sphi 0, %s245
      %s247 = sphi 0, %s245
      %s248 = sphi 0, %s247
      %s262 = sphi 0, %s248
      %s266 = sphi 0, %s266
      %s268 = sphi 0, %s266
      %s269 = sphi 0, %s268
      %s283 = sphi 0, %s269
      %s289 = sphi 0, %s291
      %s292 = sphi 0, %s289
      %s293 = sphi 0, %s292
      %s309 = sphi 0, %s293
    $region4: #{tpu_custom_call.1} parent=1 // loop_header_branch
      %25 = sbr.rel (%p23) target = $region8
    $region5: #{tpu_custom_call.1} parent=1 // loop_body
      %s27 = ssub.s32 %s22, 1
      %s28 = ssub.s32 %s22, 2
      %s29 = sadd.s32 %s22, 1
      %s30 = ssub.s32 %s22, %s29
      %p31 = scmp.eq.s32.totalorder %s30, 0
      %s33 = sadd.s32 %s32, 1
      %s34 = scalar_select %p31, %s32, %s33
      %p37 = pneg %p31
      %p38 = scmp.eq.s32.totalorder %s22, 1
      %p39 = por %p37, %p38
      %p40 = scmp.ne.s32.totalorder %s32, %s35
      %p41 = scmp.eq.s32.totalorder %s22, 0
      %p42 = por %p40, %p41
      %p43 = scmp.ne.s32.totalorder %s32, %s35
      %p44 = scmp.eq.s32.totalorder %s27, 1
      %p45 = por %p43, %p44
      %p46 = scmp.ne.s32.totalorder %s35, %s36
      %p47 = scmp.eq.s32.totalorder %s27, 0
      %p48 = por %p46, %p47
      %p49 = scmp.ne.s32.totalorder %s35, %s36
      %p50 = scmp.eq.s32.totalorder %s28, 1
      %p51 = por %p49, %p50
      %p53 = scmp.ne.s32.totalorder %s36, %s52
      %p54 = scmp.eq.s32.totalorder %s28, 0
      %p55 = por %p53, %p54
      %s57 = sadd.s32 %s56, 1
      %p60 = scmp.eq.s32.totalorder %s22, 1
      %p61 = scmp.ne.s32.totalorder %s56, %s58
      %p62 = scmp.eq.s32.totalorder %s22, 0
      %p63 = por %p61, %p62
      %p64 = scmp.ne.s32.totalorder %s56, %s58
      %p65 = scmp.eq.s32.totalorder %s27, 1
      %p66 = por %p64, %p65
      %p67 = scmp.ne.s32.totalorder %s58, %s59
      %p68 = scmp.eq.s32.totalorder %s27, 0
      %p69 = por %p67, %p68
      %p70 = scmp.ne.s32.totalorder %s58, %s59
      %p71 = scmp.eq.s32.totalorder %s28, 1
      %p72 = por %p70, %p71
      %p74 = scmp.ne.s32.totalorder %s59, %s73
      %p75 = scmp.eq.s32.totalorder %s28, 0
      %p76 = por %p74, %p75
      %s78 = sadd.s32 %s77, 1
      %p81 = scmp.eq.s32.totalorder %s22, 1
      %p82 = scmp.ne.s32.totalorder %s77, %s79
      %p83 = scmp.eq.s32.totalorder %s22, 0
      %p84 = por %p82, %p83
      %p85 = scmp.ne.s32.totalorder %s77, %s79
      %p86 = scmp.eq.s32.totalorder %s27, 1
      %p87 = por %p85, %p86
      %p88 = scmp.ne.s32.totalorder %s79, %s80
      %p89 = scmp.eq.s32.totalorder %s27, 0
      %p90 = por %p88, %p89
      %p91 = scmp.ne.s32.totalorder %s79, %s80
      %p92 = scmp.eq.s32.totalorder %s28, 1
      %p93 = por %p91, %p92
      %p95 = scmp.ne.s32.totalorder %s80, %s94
      %p96 = scmp.eq.s32.totalorder %s28, 0
      %p97 = por %p95, %p96
      %s99 = sadd.s32 %s98, 1
      %p102 = scmp.eq.s32.totalorder %s22, 1
      %p103 = scmp.ne.s32.totalorder %s98, %s100
      %p104 = scmp.eq.s32.totalorder %s22, 0
      %p105 = por %p103, %p104
      %p106 = scmp.ne.s32.totalorder %s98, %s100
      %p107 = scmp.eq.s32.totalorder %s27, 1
      %p108 = por %p106, %p107
      %p109 = scmp.ne.s32.totalorder %s100, %s101
      %p110 = scmp.eq.s32.totalorder %s27, 0
      %p111 = por %p109, %p110
      %p112 = scmp.ne.s32.totalorder %s100, %s101
      %p113 = scmp.eq.s32.totalorder %s28, 1
      %p114 = por %p112, %p113
      %p116 = scmp.ne.s32.totalorder %s101, %s115
      %p117 = scmp.eq.s32.totalorder %s28, 0
      %p118 = por %p116, %p117
      %s120 = sadd.s32 %s119, 1
      %p123 = scmp.eq.s32.totalorder %s22, 1
      %p124 = scmp.ne.s32.totalorder %s119, %s121
      %p125 = scmp.eq.s32.totalorder %s22, 0
      %p126 = por %p124, %p125
      %p127 = scmp.ne.s32.totalorder %s119, %s121
      %p128 = scmp.eq.s32.totalorder %s27, 1
      %p129 = por %p127, %p128
      %p130 = scmp.ne.s32.totalorder %s121, %s122
      %p131 = scmp.eq.s32.totalorder %s27, 0
      %p132 = por %p130, %p131
      %p133 = scmp.ne.s32.totalorder %s121, %s122
      %p134 = scmp.eq.s32.totalorder %s28, 1
      %p135 = por %p133, %p134
      %p137 = scmp.ne.s32.totalorder %s122, %s136
      %p138 = scmp.eq.s32.totalorder %s28, 0
      %p139 = por %p137, %p138
      %s141 = sadd.s32 %s140, 1
      %p144 = scmp.eq.s32.totalorder %s22, 1
      %p145 = scmp.ne.s32.totalorder %s140, %s142
      %p146 = scmp.eq.s32.totalorder %s22, 0
      %p147 = por %p145, %p146
      %p148 = scmp.ne.s32.totalorder %s140, %s142
      %p149 = scmp.eq.s32.totalorder %s27, 1
      %p150 = por %p148, %p149
      %p151 = scmp.ne.s32.totalorder %s142, %s143
      %p152 = scmp.eq.s32.totalorder %s27, 0
      %p153 = por %p151, %p152
      %p154 = scmp.ne.s32.totalorder %s142, %s143
      %p155 = scmp.eq.s32.totalorder %s28, 1
      %p156 = por %p154, %p155
      %p158 = scmp.ne.s32.totalorder %s143, %s157
      %p159 = scmp.eq.s32.totalorder %s28, 0
      %p160 = por %p158, %p159
      %s162 = sadd.s32 %s161, 1
      %p165 = scmp.eq.s32.totalorder %s22, 1
      %p166 = scmp.ne.s32.totalorder %s161, %s163
      %p167 = scmp.eq.s32.totalorder %s22, 0
      %p168 = por %p166, %p167
      %p169 = scmp.ne.s32.totalorder %s161, %s163
      %p170 = scmp.eq.s32.totalorder %s27, 1
      %p171 = por %p169, %p170
      %p172 = scmp.ne.s32.totalorder %s163, %s164
      %p173 = scmp.eq.s32.totalorder %s27, 0
      %p174 = por %p172, %p173
      %p175 = scmp.ne.s32.totalorder %s163, %s164
      %p176 = scmp.eq.s32.totalorder %s28, 1
      %p177 = por %p175, %p176
      %p179 = scmp.ne.s32.totalorder %s164, %s178
      %p180 = scmp.eq.s32.totalorder %s28, 0
      %p181 = por %p179, %p180
      %s183 = sadd.s32 %s182, 1
      %p186 = scmp.eq.s32.totalorder %s22, 1
      %p187 = scmp.ne.s32.totalorder %s182, %s184
      %p188 = scmp.eq.s32.totalorder %s22, 0
      %p189 = por %p187, %p188
      %p190 = scmp.ne.s32.totalorder %s182, %s184
      %p191 = scmp.eq.s32.totalorder %s27, 1
      %p192 = por %p190, %p191
      %p193 = scmp.ne.s32.totalorder %s184, %s185
      %p194 = scmp.eq.s32.totalorder %s27, 0
      %p195 = por %p193, %p194
      %p196 = scmp.ne.s32.totalorder %s184, %s185
      %p197 = scmp.eq.s32.totalorder %s28, 1
      %p198 = por %p196, %p197
      %p200 = scmp.ne.s32.totalorder %s185, %s199
      %p201 = scmp.eq.s32.totalorder %s28, 0
      %p202 = por %p200, %p201
      %s204 = sadd.s32 %s203, 1
      %p207 = scmp.eq.s32.totalorder %s22, 1
      %p208 = scmp.ne.s32.totalorder %s203, %s205
      %p209 = scmp.eq.s32.totalorder %s22, 0
      %p210 = por %p208, %p209
      %p211 = scmp.ne.s32.totalorder %s203, %s205
      %p212 = scmp.eq.s32.totalorder %s27, 1
      %p213 = por %p211, %p212
      %p214 = scmp.ne.s32.totalorder %s205, %s206
      %p215 = scmp.eq.s32.totalorder %s27, 0
      %p216 = por %p214, %p215
      %p217 = scmp.ne.s32.totalorder %s205, %s206
      %p218 = scmp.eq.s32.totalorder %s28, 1
      %p219 = por %p217, %p218
      %p221 = scmp.ne.s32.totalorder %s206, %s220
      %p222 = scmp.eq.s32.totalorder %s28, 0
      %p223 = por %p221, %p222
      %s225 = sadd.s32 %s224, 1
      %p228 = scmp.eq.s32.totalorder %s22, 1
      %p229 = scmp.ne.s32.totalorder %s224, %s226
      %p230 = scmp.eq.s32.totalorder %s22, 0
      %p231 = por %p229, %p230
      %p232 = scmp.ne.s32.totalorder %s224, %s226
      %p233 = scmp.eq.s32.totalorder %s27, 1
      %p234 = por %p232, %p233
      %p235 = scmp.ne.s32.totalorder %s226, %s227
      %p236 = scmp.eq.s32.totalorder %s27, 0
      %p237 = por %p235, %p236
      %p238 = scmp.ne.s32.totalorder %s226, %s227
      %p239 = scmp.eq.s32.totalorder %s28, 1
      %p240 = por %p238, %p239
      %p242 = scmp.ne.s32.totalorder %s227, %s241
      %p243 = scmp.eq.s32.totalorder %s28, 0
      %p244 = por %p242, %p243
      %s246 = sadd.s32 %s245, 1
      %p249 = scmp.eq.s32.totalorder %s22, 1
      %p250 = scmp.ne.s32.totalorder %s245, %s247
      %p251 = scmp.eq.s32.totalorder %s22, 0
      %p252 = por %p250, %p251
      %p253 = scmp.ne.s32.totalorder %s245, %s247
      %p254 = scmp.eq.s32.totalorder %s27, 1
      %p255 = por %p253, %p254
      %p256 = scmp.ne.s32.totalorder %s247, %s248
      %p257 = scmp.eq.s32.totalorder %s27, 0
      %p258 = por %p256, %p257
      %p259 = scmp.ne.s32.totalorder %s247, %s248
      %p260 = scmp.eq.s32.totalorder %s28, 1
      %p261 = por %p259, %p260
      %p263 = scmp.ne.s32.totalorder %s248, %s262
      %p264 = scmp.eq.s32.totalorder %s28, 0
      %p265 = por %p263, %p264
      %s267 = sadd.s32 %s266, 1
      %p270 = scmp.eq.s32.totalorder %s22, 1
      %p271 = scmp.ne.s32.totalorder %s266, %s268
      %p272 = scmp.eq.s32.totalorder %s22, 0
      %p273 = por %p271, %p272
      %p274 = scmp.ne.s32.totalorder %s266, %s268
      %p275 = scmp.eq.s32.totalorder %s27, 1
      %p276 = por %p274, %p275
      %p277 = scmp.ne.s32.totalorder %s268, %s269
      %p278 = scmp.eq.s32.totalorder %s27, 0
      %p279 = por %p277, %p278
      %p280 = scmp.ne.s32.totalorder %s268, %s269
      %p281 = scmp.eq.s32.totalorder %s28, 1
      %p282 = por %p280, %p281
      %p284 = scmp.ne.s32.totalorder %s269, %s283
      %p285 = scmp.eq.s32.totalorder %s28, 0
      %p286 = por %p284, %p285
      %s287 = ssub.s32 %s22, %s29
      %p288 = scmp.eq.s32.totalorder %s287, 0
      %s290 = sadd.s32 %s289, 1
      %s291 = scalar_select %p288, %s289, %s290
      %p294 = pneg %p288
      %p295 = scmp.eq.s32.totalorder %s22, 1
      %p296 = por %p294, %p295
      %p297 = scmp.ne.s32.totalorder %s289, %s292
      %p298 = scmp.eq.s32.totalorder %s22, 0
      %p299 = por %p297, %p298
      %p300 = scmp.ne.s32.totalorder %s289, %s292
      %p301 = scmp.eq.s32.totalorder %s27, 1
      %p302 = por %p300, %p301
      %p303 = scmp.ne.s32.totalorder %s292, %s293
      %p304 = scmp.eq.s32.totalorder %s27, 0
      %p305 = por %p303, %p304
      %p306 = scmp.ne.s32.totalorder %s292, %s293
      %p307 = scmp.eq.s32.totalorder %s28, 1
      %p308 = por %p306, %p307
      %p310 = scmp.ne.s32.totalorder %s293, %s309
      %p311 = scmp.eq.s32.totalorder %s28, 0
      %p312 = por %p310, %p311
      %p313 = scmp.le.s32.totalorder 1, %s22
      %p314 = scmp.lt.s32.totalorder %s22, 3
      %p315 = pnand %p313, %p314
      %p316 = pneg %p315
      // Predicated region
      $region9: #{tpu_custom_call.1} parent=5 // pred_check
        _
      $region10: #{tpu_custom_call.1} parent=5 // pred_check_branch
        %318 = sbr.rel (%p315) target = $region12
      $region11: #{tpu_custom_call.1} parent=5 // pred_region
        %s319 = ssub.s32 %s22, 1
        // Predicated region
        $region13: #{tpu_custom_call.1} parent=11 // pred_check
          %p320 = pneg %p69
        $region14: #{tpu_custom_call.1} parent=11 // pred_check_branch
          %322 = sbr.rel (%p320) target = $region16
        $region15: #{tpu_custom_call.1} parent=11 // pred_region
          _
        $region16: #{tpu_custom_call.1} parent=11 // pred_fallthru
          _
        // Predicated region
        $region17: #{tpu_custom_call.1} parent=11 // pred_check
          %p323 = pneg %p90
        $region18: #{tpu_custom_call.1} parent=11 // pred_check_branch
          %325 = sbr.rel (%p323) target = $region20
        $region19: #{tpu_custom_call.1} parent=11 // pred_region
          _
        $region20: #{tpu_custom_call.1} parent=11 // pred_fallthru
          _
        // Predicated region
        $region21: #{tpu_custom_call.1} parent=11 // pred_check
          %p326 = pneg %p111
        $region22: #{tpu_custom_call.1} parent=11 // pred_check_branch
          %328 = sbr.rel (%p326) target = $region24
        $region23: #{tpu_custom_call.1} parent=11 // pred_region
          _
        $region24: #{tpu_custom_call.1} parent=11 // pred_fallthru
          _
        // Predicated region
        $region25: #{tpu_custom_call.1} parent=11 // pred_check
          %p329 = pneg %p132
        $region26: #{tpu_custom_call.1} parent=11 // pred_check_branch
          %331 = sbr.rel (%p329) target = $region28
        $region27: #{tpu_custom_call.1} parent=11 // pred_region
          _
        $region28: #{tpu_custom_call.1} parent=11 // pred_fallthru
          _
        // Predicated region
        $region29: #{tpu_custom_call.1} parent=11 // pred_check
          %p332 = pneg %p153
        $region30: #{tpu_custom_call.1} parent=11 // pred_check_branch
          %334 = sbr.rel (%p332) target = $region32
        $region31: #{tpu_custom_call.1} parent=11 // pred_region
          _
        $region32: #{tpu_custom_call.1} parent=11 // pred_fallthru
          _
        // Predicated region
        $region33: #{tpu_custom_call.1} parent=11 // pred_check
          %p335 = pneg %p174
        $region34: #{tpu_custom_call.1} parent=11 // pred_check_branch
          %337 = sbr.rel (%p335) target = $region36
        $region35: #{tpu_custom_call.1} parent=11 // pred_region
          _
        $region36: #{tpu_custom_call.1} parent=11 // pred_fallthru
          _
        // Predicated region
        $region37: #{tpu_custom_call.1} parent=11 // pred_check
          %p338 = pneg %p195
        $region38: #{tpu_custom_call.1} parent=11 // pred_check_branch
          %340 = sbr.rel (%p338) target = $region40
        $region39: #{tpu_custom_call.1} parent=11 // pred_region
          _
        $region40: #{tpu_custom_call.1} parent=11 // pred_fallthru
          _
        // Predicated region
        $region41: #{tpu_custom_call.1} parent=11 // pred_check
          %p341 = pneg %p216
        $region42: #{tpu_custom_call.1} parent=11 // pred_check_branch
          %343 = sbr.rel (%p341) target = $region44
        $region43: #{tpu_custom_call.1} parent=11 // pred_region
          _
        $region44: #{tpu_custom_call.1} parent=11 // pred_fallthru
          _
        // Predicated region
        $region45: #{tpu_custom_call.1} parent=11 // pred_check
          %p344 = pneg %p237
        $region46: #{tpu_custom_call.1} parent=11 // pred_check_branch
          %346 = sbr.rel (%p344) target = $region48
        $region47: #{tpu_custom_call.1} parent=11 // pred_region
          _
        $region48: #{tpu_custom_call.1} parent=11 // pred_fallthru
          _
        // Predicated region
        $region49: #{tpu_custom_call.1} parent=11 // pred_check
          %p347 = pneg %p258
        $region50: #{tpu_custom_call.1} parent=11 // pred_check_branch
          %349 = sbr.rel (%p347) target = $region52
        $region51: #{tpu_custom_call.1} parent=11 // pred_region
          %s351 = ssub.s32 4096, 4096
          %352 = vsyncadd [#allocation3], %s351
          %s353 = sshll.u32 [#allocation2], 4
          %s354 = int_to_ptr.vmem [resolvable:$true] %s353
          %359 = dma.hbm_to_vmem [thread:$0]  %s10, 4096, %s354, [#allocation3], 128, 128, 8
        $region52: #{tpu_custom_call.1} parent=11 // pred_fallthru
          _
        // Predicated region
        $region53: #{tpu_custom_call.1} parent=11 // pred_check
          %p360 = pneg %p279
        $region54: #{tpu_custom_call.1} parent=11 // pred_check_branch
          %362 = sbr.rel (%p360) target = $region56
        $region55: #{tpu_custom_call.1} parent=11 // pred_region
          _
        $region56: #{tpu_custom_call.1} parent=11 // pred_fallthru
          _
      $region12: #{tpu_custom_call.1} parent=5 // pred_fallthru
        _
      %p363 = scmp.lt.s32.totalorder %s22, 2
      // Predicated region
      $region57: #{tpu_custom_call.1} parent=5 // pred_check
        %p364 = pneg %p363
      $region58: #{tpu_custom_call.1} parent=5 // pred_check_branch
        %366 = sbr.rel (%p364) target = $region60
      $region59: #{tpu_custom_call.1} parent=5 // pred_region
        // Predicated region
        $region61: #{tpu_custom_call.1} parent=59 // pred_check
          %p367 = pneg %p42
        $region62: #{tpu_custom_call.1} parent=59 // pred_check_branch
          %369 = sbr.rel (%p367) target = $region64
        $region63: #{tpu_custom_call.1} parent=59 // pred_region
          %s370 = smul.u32 2, %s22
          %p371 = scmp.lt.s32.totalorder %s370, 3
          %s372 = scalar_select %p371, %s370, 3
          %s373 = smul.addr %s372, 4
          %s374 = scalar_lea.vmem %s0, %s373
          %s375 = smul.u32 2, %s22
        $region64: #{tpu_custom_call.1} parent=59 // pred_fallthru
          _
      $region60: #{tpu_custom_call.1} parent=5 // pred_fallthru
        _
      %p376 = scmp.le.s32.totalorder 1, %s22
      %p377 = scmp.lt.s32.totalorder %s22, 3
      %p378 = pnand %p376, %p377
      %p379 = pneg %p378
      // Predicated region
      $region65: #{tpu_custom_call.1} parent=5 // pred_check
        _
      $region66: #{tpu_custom_call.1} parent=5 // pred_check_branch
        %381 = sbr.rel (%p378) target = $region68
      $region67: #{tpu_custom_call.1} parent=5 // pred_region
        %s382 = ssub.s32 %s22, 1
        // Predicated region
        $region69: #{tpu_custom_call.1} parent=67 // pred_check
          %p383 = pneg %p258
        $region70: #{tpu_custom_call.1} parent=67 // pred_check_branch
          %385 = sbr.rel (%p383) target = $region72
        $region71: #{tpu_custom_call.1} parent=67 // pred_region
          %386 = dma.done [#allocation3], 4096
        $region72: #{tpu_custom_call.1} parent=67 // pred_fallthru
          _
        %s387 = smul.u32 2, %s27
        %p388 = scmp.lt.s32.totalorder %s387, 3
        %s389 = scalar_select %p388, %s387, 3
        %s390 = smul.addr %s389, 4
        %s391 = scalar_lea.vmem %s0, %s390
        %p392 = pneg %p48
        %p393 = pneg %p45
        %p394 = pneg %p69
        %p395 = pneg %p66
        %p396 = pneg %p90
        %p397 = pneg %p87
        %p398 = pneg %p111
        %p399 = pneg %p108
        %p400 = pneg %p132
        %p401 = pneg %p129
        %p402 = pneg %p153
        %p403 = pneg %p150
        %p404 = pneg %p174
        %p405 = pneg %p171
        %p406 = pneg %p195
        %p407 = pneg %p192
        %p408 = pneg %p216
        %p409 = pneg %p213
        %p410 = pneg %p237
        %p411 = pneg %p234
        %p412 = pneg %p258
        %p413 = pneg %p255
        %p414 = pneg %p279
        %p415 = pneg %p276
        %p416 = pneg %p305
        %p417 = pneg %p302
        %s418 = sand.u32 %s292, 1
        %s419 = scalar_lea.sflag [#allocation4], %s418
        %s420 = sand.u32 %s292, 1
        %s421 = smul.addr %s420, 2
        %s422 = scalar_lea.vmem [#allocation5], %s421
        %s423 = smul.u32 2, %s27
        %p424 = scmp.lt.s32.totalorder %s423, 3
        %s425 = scalar_select %p424, %s423, 3
        %s426 = smul.addr %s425, 4
        %s427 = scalar_lea.vmem %s0, %s426
        %s428 = smul.u32 2, %s27
        %v429 = vld [vmem:[%s427] sm:$0xff]
        %v430 = vld [vmem:[%s1] sm:$0xff]
        %v431 = vld [vmem:[%s1 + $0x8] sm:$0xff]
        %v432 = vld [vmem:[%s2] sm:$0xff]
        %v433 = vld [vmem:[%s2 + $0x8] sm:$0xff]
        %v434 = vld [vmem:[%s3] sm:$0xff]
        %v435 = vld [vmem:[%s3 + $0x8] sm:$0xff]
        %v437 = vcombine.high %v429, %v429
        %vm438 = vcmask 31744
        %v440 = vsel %vm438, %v430, 0
        %v443 = vsel %vm438, %v431, 0
        %vm445 = vcmask 1043456
        %v446 = vsel %vm445, %v429, 0
        %v448 = vsel %vm445, %v437, 0
        %450 = vmatprep.subr.mxu0 %v448
        %451 = vmatpush1.msra.mxu0 %v446
        %452 = vmatprep.subr.mxu0 0.0
        %453 = vmatpush1.msra.mxu0 0.0
        %454 = vmatprep.subr.mxu0 0.0
        %455 = vmatpush1.msra.mxu0 0.0
        %456 = vmatprep.subr.mxu0 0.0
        %457 = vmatpush1.msra.mxu0 0.0
        %458 = vmatprep.subr.mxu0 0.0
        %459 = vmatpush1.msra.mxu0 0.0
        %460 = vmatprep.subr.mxu0 0.0
        %461 = vmatpush1.msra.mxu0 0.0
        %462 = vmatprep.subr.mxu0 0.0
        %463 = vmatpush1.msra.mxu0 0.0
        %464 = vmatprep.subr.mxu0 0.0
        %465 = vmatpush1.msra.mxu0 0.0
        %466 = vmatprep.subr.mxu0 0.0
        %467 = vmatpush1.msra.mxu0 0.0
        %468 = vmatprep.subr.mxu0 0.0
        %469 = vmatpush1.msra.mxu0 0.0
        %470 = vmatprep.subr.mxu0 0.0
        %471 = vmatpush1.msra.mxu0 0.0
        %472 = vmatprep.subr.mxu0 0.0
        %473 = vmatpush1.msra.mxu0 0.0
        %474 = vmatprep.subr.mxu0 0.0
        %475 = vmatpush1.msra.mxu0 0.0
        %476 = vmatprep.subr.mxu0 0.0
        %477 = vmatpush1.msra.mxu0 0.0
        %478 = vmatprep.subr.mxu0 0.0
        %479 = vmatpush1.msra.mxu0 0.0
        %480 = vmatprep.subr.mxu0 0.0
        %481 = vmatpush1.msra.mxu0 0.0
        %482 = vmatprep.subr.mxu0 0.0
        %483 = vmatpush1.msra.mxu0 0.0
        %484 = vmatprep.subr.mxu0 0.0
        %485 = vmatpush1.msra.mxu0 0.0
        %486 = vmatprep.subr.mxu0 0.0
        %487 = vmatpush1.msra.mxu0 0.0
        %488 = vmatprep.subr.mxu0 0.0
        %489 = vmatpush1.msra.mxu0 0.0
        %490 = vmatprep.subr.mxu0 0.0
        %491 = vmatpush1.msra.mxu0 0.0
        %492 = vmatprep.subr.mxu0 0.0
        %493 = vmatpush1.msra.mxu0 0.0
        %494 = vmatprep.subr.mxu0 0.0
        %495 = vmatpush1.msra.mxu0 0.0
        %496 = vmatprep.subr.mxu0 0.0
        %497 = vmatpush1.msra.mxu0 0.0
        %498 = vmatprep.subr.mxu0 0.0
        %499 = vmatpush1.msra.mxu0 0.0
        %500 = vmatprep.subr.mxu0 0.0
        %501 = vmatpush1.msra.mxu0 0.0
        %502 = vmatprep.subr.mxu0 0.0
        %503 = vmatpush1.msra.mxu0 0.0
        %504 = vmatprep.subr.mxu0 0.0
        %505 = vmatpush1.msra.mxu0 0.0
        %506 = vmatprep.subr.mxu0 0.0
        %507 = vmatpush1.msra.mxu0 0.0
        %508 = vmatprep.subr.mxu0 0.0
        %509 = vmatpush1.msra.mxu0 0.0
        %510 = vmatprep.subr.mxu0 0.0
        %511 = vmatpush1.msra.mxu0 0.0
        %512 = vmatprep.subr.mxu0 0.0
        %513 = vmatpush1.msra.mxu0 0.0
        %514 = vmatprep.mubr.f32.mxu0 0.0
        %515 = vmatmul.mubr.f32.gmra.mrb[0].mxu0 %v440
        %v516 = vpop.f32.mrb[0].mxu0
        %v517 = vadd.f32 0.0, %v516
        %v518 = vpop.f32.mrb[0].mxu0
        %v519 = vadd.f32 0.0, %v518
        %520 = vmatprep.mubr.f32.mxu0 0.0
        %521 = vmatmul.mubr.f32.gmra.mrb[0].mxu0 %v443
        %v522 = vpop.f32.mrb[0].mxu0
        %v523 = vadd.f32 0.0, %v522
        %v524 = vpop.f32.mrb[0].mxu0
        %v525 = vadd.f32 0.0, %v524
        %526 = vdwg.mxu0
        %528 = vset.pattern.permute.xlu0 0
        %529 = vperm.xlu0 %528, %v432
        %v530 = vpop.permute.xlu0 %529
        %533 = vset.pattern.permute.xlu0 0
        %534 = vperm.xlu0 %533, %v433
        %v535 = vpop.permute.xlu0 %534
        %v537 = vmul.f32 %v517, %v530
        %v538 = vmul.f32 %v519, %v530
        %v539 = vmul.f32 %v523, %v535
        %v540 = vmul.f32 %v525, %v535
        %542 = vset.pattern.permute.xlu0 0
        %543 = vperm.xlu0 %542, %v434
        %v544 = vpop.permute.xlu0 %543
        %547 = vset.pattern.permute.xlu0 0
        %548 = vperm.xlu0 %547, %v435
        %v549 = vpop.permute.xlu0 %548
        %v551 = vadd.f32 %v537, %v544
        %v552 = vadd.f32 %v538, %v544
        %v553 = vadd.f32 %v539, %v549
        %v554 = vadd.f32 %v540, %v549
        %v555 = vmax.f32 %v551, 0.0
        %v556 = vmax.f32 %v552, 0.0
        %v557 = vmax.f32 %v553, 0.0
        %v558 = vmax.f32 %v554, 0.0
        %v559 = vld [vmem:[%s4] sm:$0xff]
        %v560 = vld [vmem:[%s4 + $0x8] sm:$0xff]
        %v561 = vld [vmem:[%s5] sm:$0xff]
        %v562 = vld [vmem:[%s5 + $0x8] sm:$0xff]
        %v563 = vld [vmem:[%s6] sm:$0xff]
        %v564 = vld [vmem:[%s6 + $0x8] sm:$0xff]
        %vm565 = vcmask 130048
        %v567 = vsel %vm565, %v559, 0
        %v570 = vsel %vm565, %v560, 0
        %572 = vmatprep.subr.mxu0 %v556
        %573 = vmatpush1.msra.mxu0 %v555
        %574 = vmatprep.subr.mxu0 %v558
        %575 = vmatpush1.msra.mxu0 %v557
        %576 = vmatprep.subr.mxu0 0.0
        %577 = vmatpush1.msra.mxu0 0.0
        %578 = vmatprep.subr.mxu0 0.0
        %579 = vmatpush1.msra.mxu0 0.0
        %580 = vmatprep.subr.mxu0 0.0
        %581 = vmatpush1.msra.mxu0 0.0
        %582 = vmatprep.subr.mxu0 0.0
        %583 = vmatpush1.msra.mxu0 0.0
        %584 = vmatprep.subr.mxu0 0.0
        %585 = vmatpush1.msra.mxu0 0.0
        %586 = vmatprep.subr.mxu0 0.0
        %587 = vmatpush1.msra.mxu0 0.0
        %588 = vmatprep.subr.mxu0 0.0
        %589 = vmatpush1.msra.mxu0 0.0
        %590 = vmatprep.subr.mxu0 0.0
        %591 = vmatpush1.msra.mxu0 0.0
        %592 = vmatprep.subr.mxu0 0.0
        %593 = vmatpush1.msra.mxu0 0.0
        %594 = vmatprep.subr.mxu0 0.0
        %595 = vmatpush1.msra.mxu0 0.0
        %596 = vmatprep.subr.mxu0 0.0
        %597 = vmatpush1.msra.mxu0 0.0
        %598 = vmatprep.subr.mxu0 0.0
        %599 = vmatpush1.msra.mxu0 0.0
        %600 = vmatprep.subr.mxu0 0.0
        %601 = vmatpush1.msra.mxu0 0.0
        %602 = vmatprep.subr.mxu0 0.0
        %603 = vmatpush1.msra.mxu0 0.0
        %604 = vmatprep.subr.mxu0 0.0
        %605 = vmatpush1.msra.mxu0 0.0
        %606 = vmatprep.subr.mxu0 0.0
        %607 = vmatpush1.msra.mxu0 0.0
        %608 = vmatprep.subr.mxu0 0.0
        %609 = vmatpush1.msra.mxu0 0.0
        %610 = vmatprep.subr.mxu0 0.0
        %611 = vmatpush1.msra.mxu0 0.0
        %612 = vmatprep.subr.mxu0 0.0
        %613 = vmatpush1.msra.mxu0 0.0
        %614 = vmatprep.subr.mxu0 0.0
        %615 = vmatpush1.msra.mxu0 0.0
        %616 = vmatprep.subr.mxu0 0.0
        %617 = vmatpush1.msra.mxu0 0.0
        %618 = vmatprep.subr.mxu0 0.0
        %619 = vmatpush1.msra.mxu0 0.0
        %620 = vmatprep.subr.mxu0 0.0
        %621 = vmatpush1.msra.mxu0 0.0
        %622 = vmatprep.subr.mxu0 0.0
        %623 = vmatpush1.msra.mxu0 0.0
        %624 = vmatprep.subr.mxu0 0.0
        %625 = vmatpush1.msra.mxu0 0.0
        %626 = vmatprep.subr.mxu0 0.0
        %627 = vmatpush1.msra.mxu0 0.0
        %628 = vmatprep.subr.mxu0 0.0
        %629 = vmatpush1.msra.mxu0 0.0
        %630 = vmatprep.subr.mxu0 0.0
        %631 = vmatpush1.msra.mxu0 0.0
        %632 = vmatprep.subr.mxu0 0.0
        %633 = vmatpush1.msra.mxu0 0.0
        %634 = vmatprep.subr.mxu0 0.0
        %635 = vmatpush1.msra.mxu0 0.0
        %636 = vmatprep.mubr.f32.mxu0 0.0
        %637 = vmatmul.mubr.f32.gmra.mrb[0].mxu0 %v567
        %v638 = vpop.f32.mrb[0].mxu0
        %v639 = vadd.f32 0.0, %v638
        %v640 = vpop.f32.mrb[0].mxu0
        %v641 = vadd.f32 0.0, %v640
        %642 = vmatprep.mubr.f32.mxu0 0.0
        %643 = vmatmul.mubr.f32.gmra.mrb[0].mxu0 %v570
        %v644 = vpop.f32.mrb[0].mxu0
        %v645 = vadd.f32 0.0, %v644
        %v646 = vpop.f32.mrb[0].mxu0
        %v647 = vadd.f32 0.0, %v646
        %648 = vdwg.mxu0
        %650 = vset.pattern.permute.xlu0 0
        %651 = vperm.xlu0 %650, %v561
        %v652 = vpop.permute.xlu0 %651
        %655 = vset.pattern.permute.xlu0 0
        %656 = vperm.xlu0 %655, %v562
        %v657 = vpop.permute.xlu0 %656
        %v659 = vmul.f32 %v639, %v652
        %v660 = vmul.f32 %v641, %v652
        %v661 = vmul.f32 %v645, %v657
        %v662 = vmul.f32 %v647, %v657
        %664 = vset.pattern.permute.xlu0 0
        %665 = vperm.xlu0 %664, %v563
        %v666 = vpop.permute.xlu0 %665
        %669 = vset.pattern.permute.xlu0 0
        %670 = vperm.xlu0 %669, %v564
        %v671 = vpop.permute.xlu0 %670
        %v673 = vadd.f32 %v659, %v666
        %v674 = vadd.f32 %v660, %v666
        %v675 = vadd.f32 %v661, %v671
        %v676 = vadd.f32 %v662, %v671
        %v677 = vmax.f32 %v673, 0.0
        %v678 = vmax.f32 %v674, 0.0
        %v679 = vmax.f32 %v675, 0.0
        %v680 = vmax.f32 %v676, 0.0
        %v681 = vld [vmem:[%s7] sm:$0x3]
        %v682 = vld [vmem:[%s8] sm:$0x3]
        %v683 = vld [vmem:[%s9] sm:$0x3]
        %v685 = vsel %vm565, %v681, 0
        %687 = vmatprep.subr.mxu0 %v678
        %688 = vmatpush1.msra.mxu0 %v677
        %689 = vmatprep.subr.mxu0 %v680
        %690 = vmatpush1.msra.mxu0 %v679
        %691 = vmatprep.subr.mxu0 0.0
        %692 = vmatpush1.msra.mxu0 0.0
        %693 = vmatprep.subr.mxu0 0.0
        %694 = vmatpush1.msra.mxu0 0.0
        %695 = vmatprep.subr.mxu0 0.0
        %696 = vmatpush1.msra.mxu0 0.0
        %697 = vmatprep.subr.mxu0 0.0
        %698 = vmatpush1.msra.mxu0 0.0
        %699 = vmatprep.subr.mxu0 0.0
        %700 = vmatpush1.msra.mxu0 0.0
        %701 = vmatprep.subr.mxu0 0.0
        %702 = vmatpush1.msra.mxu0 0.0
        %703 = vmatprep.subr.mxu0 0.0
        %704 = vmatpush1.msra.mxu0 0.0
        %705 = vmatprep.subr.mxu0 0.0
        %706 = vmatpush1.msra.mxu0 0.0
        %707 = vmatprep.subr.mxu0 0.0
        %708 = vmatpush1.msra.mxu0 0.0
        %709 = vmatprep.subr.mxu0 0.0
        %710 = vmatpush1.msra.mxu0 0.0
        %711 = vmatprep.subr.mxu0 0.0
        %712 = vmatpush1.msra.mxu0 0.0
        %713 = vmatprep.subr.mxu0 0.0
        %714 = vmatpush1.msra.mxu0 0.0
        %715 = vmatprep.subr.mxu0 0.0
        %716 = vmatpush1.msra.mxu0 0.0
        %717 = vmatprep.subr.mxu0 0.0
        %718 = vmatpush1.msra.mxu0 0.0
        %719 = vmatprep.subr.mxu0 0.0
        %720 = vmatpush1.msra.mxu0 0.0
        %721 = vmatprep.subr.mxu0 0.0
        %722 = vmatpush1.msra.mxu0 0.0
        %723 = vmatprep.subr.mxu0 0.0
        %724 = vmatpush1.msra.mxu0 0.0
        %725 = vmatprep.subr.mxu0 0.0
        %726 = vmatpush1.msra.mxu0 0.0
        %727 = vmatprep.subr.mxu0 0.0
        %728 = vmatpush1.msra.mxu0 0.0
        %729 = vmatprep.subr.mxu0 0.0
        %730 = vmatpush1.msra.mxu0 0.0
        %731 = vmatprep.subr.mxu0 0.0
        %732 = vmatpush1.msra.mxu0 0.0
        %733 = vmatprep.subr.mxu0 0.0
        %734 = vmatpush1.msra.mxu0 0.0
        %735 = vmatprep.subr.mxu0 0.0
        %736 = vmatpush1.msra.mxu0 0.0
        %737 = vmatprep.subr.mxu0 0.0
        %738 = vmatpush1.msra.mxu0 0.0
        %739 = vmatprep.subr.mxu0 0.0
        %740 = vmatpush1.msra.mxu0 0.0
        %741 = vmatprep.subr.mxu0 0.0
        %742 = vmatpush1.msra.mxu0 0.0
        %743 = vmatprep.subr.mxu0 0.0
        %744 = vmatpush1.msra.mxu0 0.0
        %745 = vmatprep.subr.mxu0 0.0
        %746 = vmatpush1.msra.mxu0 0.0
        %747 = vmatprep.subr.mxu0 0.0
        %748 = vmatpush1.msra.mxu0 0.0
        %749 = vmatprep.subr.mxu0 0.0
        %750 = vmatpush1.msra.mxu0 0.0
        %751 = vmatprep.mubr.f32.mxu0 0.0
        %752 = vmatmul.mubr.f32.gmra.mrb[0].mxu0 %v685
        %v753 = vpop.f32.mrb[0].mxu0
        %v754 = vadd.f32 0.0, %v753
        %v755 = vpop.f32.mrb[0].mxu0
        %v756 = vadd.f32 0.0, %v755
        %757 = vdwg.mxu0
        %759 = vset.pattern.permute.xlu0 0
        %760 = vperm.xlu0 %759, %v682
        %v761 = vpop.permute.xlu0 %760
        %v763 = vmul.f32 %v754, %v761
        %v764 = vmul.f32 %v756, %v761
        %766 = vset.pattern.permute.xlu0 0
        %767 = vperm.xlu0 %766, %v683
        %v768 = vpop.permute.xlu0 %767
        %v770 = vadd.f32 %v763, %v768
        %v771 = vadd.f32 %v764, %v768
        %v772 = vmax.f32 %v770, 0.0
        %v773 = vmax.f32 %v771, 0.0
        %v774 = vld [vmem:[#allocation2] sm:$0xff]
        %v775 = vld [vmem:[#allocation2 + $0x8] sm:$0xff]
        %v776 = vld [vmem:[#allocation2 + $0x10] sm:$0xff]
        %v777 = vld [vmem:[#allocation2 + $0x18] sm:$0xff]
        %v778 = vld [vmem:[#allocation2 + $0x20] sm:$0xff]
        %v779 = vld [vmem:[#allocation2 + $0x28] sm:$0xff]
        %v780 = vld [vmem:[#allocation2 + $0x30] sm:$0xff]
        %v781 = vld [vmem:[#allocation2 + $0x38] sm:$0xff]
        %v782 = vld [vmem:[#allocation2 + $0x40] sm:$0xff]
        %v783 = vld [vmem:[#allocation2 + $0x48] sm:$0xff]
        %v784 = vld [vmem:[#allocation2 + $0x50] sm:$0xff]
        %v785 = vld [vmem:[#allocation2 + $0x58] sm:$0xff]
        %v786 = vld [vmem:[#allocation2 + $0x60] sm:$0xff]
        %v787 = vld [vmem:[#allocation2 + $0x68] sm:$0xff]
        %v788 = vld [vmem:[#allocation2 + $0x70] sm:$0xff]
        %v789 = vld [vmem:[#allocation2 + $0x78] sm:$0xff]
        %v790 = vld [vmem:[#allocation2 + $0x80] sm:$0xff]
        %v791 = vld [vmem:[#allocation2 + $0x88] sm:$0xff]
        %v792 = vld [vmem:[#allocation2 + $0x90] sm:$0xff]
        %v793 = vld [vmem:[#allocation2 + $0x98] sm:$0xff]
        %v794 = vld [vmem:[#allocation2 + $0xa0] sm:$0xff]
        %v795 = vld [vmem:[#allocation2 + $0xa8] sm:$0xff]
        %v796 = vld [vmem:[#allocation2 + $0xb0] sm:$0xff]
        %v797 = vld [vmem:[#allocation2 + $0xb8] sm:$0xff]
        %v798 = vld [vmem:[#allocation2 + $0xc0] sm:$0xff]
        %v799 = vld [vmem:[#allocation2 + $0xc8] sm:$0xff]
        %v800 = vld [vmem:[#allocation2 + $0xd0] sm:$0xff]
        %v801 = vld [vmem:[#allocation2 + $0xd8] sm:$0xff]
        %v802 = vld [vmem:[#allocation2 + $0xe0] sm:$0xff]
        %v803 = vld [vmem:[#allocation2 + $0xe8] sm:$0xff]
        %v804 = vld [vmem:[#allocation2 + $0xf0] sm:$0xff]
        %v805 = vld [vmem:[#allocation2 + $0xf8] sm:$0xff]
        %v806 = vld [vmem:[%s11] sm:$0x1]
        %v808 = vlaneseq
        %v809 = vshrl.u32 %v808, 7
        %v810 = vsub.s32 0, %v809
        %v811 = vrot.slane %v806, %v810
        %813 = vmatprep.subr.mxu0 0.0
        %814 = vmatpush1.msra.mxu0 %v774
        %815 = vmatprep.subr.mxu0 0.0
        %816 = vmatpush1.msra.mxu0 %v775
        %817 = vmatprep.subr.mxu0 0.0
        %818 = vmatpush1.msra.mxu0 %v776
        %819 = vmatprep.subr.mxu0 0.0
        %820 = vmatpush1.msra.mxu0 %v777
        %821 = vmatprep.subr.mxu0 0.0
        %822 = vmatpush1.msra.mxu0 %v778
        %823 = vmatprep.subr.mxu0 0.0
        %824 = vmatpush1.msra.mxu0 %v779
        %825 = vmatprep.subr.mxu0 0.0
        %826 = vmatpush1.msra.mxu0 %v780
        %827 = vmatprep.subr.mxu0 0.0
        %828 = vmatpush1.msra.mxu0 %v781
        %829 = vmatprep.subr.mxu0 0.0
        %830 = vmatpush1.msra.mxu0 %v782
        %831 = vmatprep.subr.mxu0 0.0
        %832 = vmatpush1.msra.mxu0 %v783
        %833 = vmatprep.subr.mxu0 0.0
        %834 = vmatpush1.msra.mxu0 %v784
        %835 = vmatprep.subr.mxu0 0.0
        %836 = vmatpush1.msra.mxu0 %v785
        %837 = vmatprep.subr.mxu0 0.0
        %838 = vmatpush1.msra.mxu0 %v786
        %839 = vmatprep.subr.mxu0 0.0
        %840 = vmatpush1.msra.mxu0 %v787
        %841 = vmatprep.subr.mxu0 0.0
        %842 = vmatpush1.msra.mxu0 %v788
        %843 = vmatprep.subr.mxu0 0.0
        %844 = vmatpush1.msra.mxu0 %v789
        %845 = vmatprep.subr.mxu0 0.0
        %846 = vmatpush1.msra.mxu0 %v790
        %847 = vmatprep.subr.mxu0 0.0
        %848 = vmatpush1.msra.mxu0 %v791
        %849 = vmatprep.subr.mxu0 0.0
        %850 = vmatpush1.msra.mxu0 %v792
        %851 = vmatprep.subr.mxu0 0.0
        %852 = vmatpush1.msra.mxu0 %v793
        %853 = vmatprep.subr.mxu0 0.0
        %854 = vmatpush1.msra.mxu0 %v794
        %855 = vmatprep.subr.mxu0 0.0
        %856 = vmatpush1.msra.mxu0 %v795
        %857 = vmatprep.subr.mxu0 0.0
        %858 = vmatpush1.msra.mxu0 %v796
        %859 = vmatprep.subr.mxu0 0.0
        %860 = vmatpush1.msra.mxu0 %v797
        %861 = vmatprep.subr.mxu0 0.0
        %862 = vmatpush1.msra.mxu0 %v798
        %863 = vmatprep.subr.mxu0 0.0
        %864 = vmatpush1.msra.mxu0 %v799
        %865 = vmatprep.subr.mxu0 0.0
        %866 = vmatpush1.msra.mxu0 %v800
        %867 = vmatprep.subr.mxu0 0.0
        %868 = vmatpush1.msra.mxu0 %v801
        %869 = vmatprep.subr.mxu0 0.0
        %870 = vmatpush1.msra.mxu0 %v802
        %871 = vmatprep.subr.mxu0 0.0
        %872 = vmatpush1.msra.mxu0 %v803
        %873 = vmatprep.subr.mxu0 0.0
        %874 = vmatpush1.msra.mxu0 %v804
        %875 = vmatprep.subr.mxu0 0.0
        %876 = vmatpush1.msra.mxu0 %v805
        %877 = vmatprep.mubr.f32.mxu0 %v773
        %878 = vmatmul.mubr.f32.gmra.mrb[0].mxu0 %v772
        %v879 = vpop.f32.mrb[0].mxu0
        %v880 = vadd.f32 %v811, %v879
        %v881 = vpop.f32.mrb[0].mxu0
        %882 = vdwg.mxu0
        %883 = vst [vmem:[%s422] sm:$0x3] %v880
        %s884 = sand.u32 %s292, 1
        %s885 = scalar_lea.sflag [#allocation4], %s884
        %s886 = sand.u32 %s292, 1
        %s887 = smul.addr %s886, 2
        %s888 = scalar_lea.vmem [#allocation5], %s887
        // Predicated region
        $region73: #{tpu_custom_call.1} parent=67 // pred_check
          %p889 = pneg %p302
        $region74: #{tpu_custom_call.1} parent=67 // pred_check_branch
          %891 = sbr.rel (%p889) target = $region76
        $region75: #{tpu_custom_call.1} parent=67 // pred_region
          %s893 = ssub.s32 32, 32
          %894 = vsyncadd %s885, %s893
          %s895 = smul.addr %s27, 32
          %s896 = scalar_lea.hbm %s12, %s895
          %s898 = sshll.u32 %s888, 4
          %s899 = int_to_ptr.vmem [resolvable:$true] %s898
          %901 = dma.vmem_to_hbm [thread:$0]  %s899, 32, %s896, %s885
        $region76: #{tpu_custom_call.1} parent=67 // pred_fallthru
          _
      $region68: #{tpu_custom_call.1} parent=5 // pred_fallthru
        _
      %p902 = scmp.le.s32.totalorder 2, %s22
      // Predicated region
      $region77: #{tpu_custom_call.1} parent=5 // pred_check
        %p903 = pneg %p902
      $region78: #{tpu_custom_call.1} parent=5 // pred_check_branch
        %905 = sbr.rel (%p903) target = $region80
      $region79: #{tpu_custom_call.1} parent=5 // pred_region
        %s906 = ssub.s32 %s22, 2
        // Predicated region
        $region81: #{tpu_custom_call.1} parent=79 // pred_check
          %p907 = pneg %p308
        $region82: #{tpu_custom_call.1} parent=79 // pred_check_branch
          %909 = sbr.rel (%p907) target = $region84
        $region83: #{tpu_custom_call.1} parent=79 // pred_region
          %s910 = sand.u32 %s293, 1
          %s911 = scalar_lea.sflag [#allocation4], %s910
          %s912 = sand.u32 %s293, 1
          %s913 = smul.addr %s912, 2
          %s914 = scalar_lea.vmem [#allocation5], %s913
          %915 = dma.done %s911, 32
        $region84: #{tpu_custom_call.1} parent=79 // pred_fallthru
          _
      $region80: #{tpu_custom_call.1} parent=5 // pred_fallthru
        _
    $region6: #{tpu_custom_call.1} parent=1 // loop_footer
      %s26 = sadd.s32 1, %s22
    $region7: #{tpu_custom_call.1} parent=1 // loop_footer_branch
      %21 = sbr.rel target = $region3
    $region8: #{tpu_custom_call.1} parent=1 // loop_exit
      _
    %916 = vsyncpa [#allocation3], 1
    %s917 = scalar_lea.sflag [#allocation3], 1
    %918 = vsyncpa %s917, 1
    %919 = vsyncpa [#allocation4], 1
    %s920 = scalar_lea.sflag [#allocation4], 1
    %921 = vsyncpa %s920, 1

</llo_original>
